<compile_context>
chip_gen: v7x
topology: tpu7x:2x2x1
jax: 0.10.0
libtpu: 0.0.40
codegen_flags: <defaults>
</compile_context>

<pallas_src>
import math
import numpy as np
import jax
import jax.numpy as jnp
from jax.experimental import pallas as pl
from jax.experimental.pallas import tpu as pltpu


def char_encoder_kernel(x_ref, m_ref, e_ref, w_ref, b_ref, o_ref):
    # x_ref: (TB*L, E) bf16   flattened batch (L consecutive rows per example)
    # m_ref: (TB, L)   f32    1 = valid position, 0 = padding
    # e_ref: (TB*L, 2) bf16   boundary masks: col 0 = (pos%L != 0), col 1 = (pos%L != L-1)
    # w_ref: (3E, H)   bf16   conv taps stacked along K: [w_k0; w_k1; w_k2]
    # b_ref: (1, H)    f32
    # o_ref: (TB, H)   f32
    tb, H = o_ref.shape
    M, E = x_ref.shape
    L = M // tb

    x = x_ref[...]                                            # (M, E) bf16
    edge = e_ref[...]                                         # (M, 2) bf16

    # Per-example +/-1 sequence shifts (Conv1d padding=1): shift the flat tile by one row, then
    # zero the rows that wrapped across example boundaries with the precomputed edge masks
    # (no in-kernel iota / mod / compares / selects).
    zrow = jnp.zeros((1, E), x.dtype)
    x_prev = jnp.concatenate([zrow, x[: M - 1, :]], axis=0) * edge[:, 0:1]   # x_prev[t] = x[t-1]
    x_next = jnp.concatenate([x[1:, :], zrow], axis=0) * edge[:, 1:2]        # x_next[t] = x[t+1]

    # im2col operand and a single fused MXU matmul (K = 3E), f32 accumulation.
    xi = jnp.concatenate([x_prev, x, x_next], axis=-1)        # (M, 3E) bf16
    conv = jnp.dot(xi, w_ref[...], preferred_element_type=jnp.float32)       # (M, H) f32

    h = jnp.maximum(conv + b_ref[...], 0.0)                   # ReLU, (M, H) f32
    h = h.reshape(tb, L, H)                                   # layout-preserving reshape

    pen = ((1.0 - m_ref[...]) * 1e10)[:, :, None]             # (tb, L, 1) f32
    o_ref[...] = jnp.max(h - pen, axis=1)                     # max over the L positions


def _pad_lanes(n):
    return ((n + 127) // 128) * 128


def _vmem_budget_bytes():
    """Generation-aware VMEM budget: ~48 MiB on v7x (64 MiB VMEM), ~96-100 MiB on v5e/v6e."""
    cap = 64 * 1024 * 1024
    try:
        cap = int(pltpu.get_tpu_info().vmem_capacity_bytes)
    except Exception:
        pass
    return min((cap * 3) // 4, 100 * 1024 * 1024)


def _pick_batch_tile(B, L, E, H, vmem_budget_bytes):
    """Examples per grid step: ~4096 im2col rows/step, VMEM- and dual-TC-aware."""
    # Padded VMEM bytes attributable to one example (L rows): double-buffered pipelined
    # operands plus the in-kernel temporaries (shifted copies, im2col tile, f32 conv tiles).
    pipelined = 2 * (L * _pad_lanes(E) * 2        # x block (bf16)
                     + _pad_lanes(L) * 4          # mask block row (f32)
                     + _pad_lanes(H) * 4)         # output block row (f32)
    temps = L * (3 * _pad_lanes(3 * E) * 2        # x_prev / x_next / im2col (bf16)
                 + 3 * _pad_lanes(H) * 4)         # conv / relu / masked (f32)
    per_example = pipelined + temps
    cap = max(8, vmem_budget_bytes // (2 * per_example))   # 2x slack for spills / regalloc

    tb = pl.cdiv(4096, L)                         # target ~4096 rows per MXU call
    if B >= 32:
        # Keep the grid at >= ~4 steps so both v7x TensorCores get >= 2 pipelined steps each.
        tb = min(tb, ((pl.cdiv(B, 4) + 7) // 8) * 8)
    tb = min(tb, cap)
    return max(8, (tb // 8) * 8)                  # sublane-align the (tb, H) output block


def char_encoder_forward(x, mask, weight, bias):
    """x: (B, L, E), mask: (B, L), weight: (H, E, 3), bias: (H,)  ->  (B, H) f32."""
    B, L, E = x.shape
    H = weight.shape[0]

    vmem_limit = _vmem_budget_bytes()
    tb = _pick_batch_tile(B, L, E, H, vmem_limit)
    if B <= tb:
        tb, Bp = B, B
    else:
        Bp = pl.cdiv(B, tb) * tb

    # Flattened bf16 activations, dense (B, L) f32 mask; pad batch with fully-masked examples.
    x2 = x.reshape(B * L, E).astype(jnp.bfloat16)
    m2 = mask.astype(jnp.float32)
    if Bp != B:
        x2 = jnp.pad(x2, ((0, (Bp - B) * L), (0, 0)))
        m2 = jnp.pad(m2, ((0, Bp - B), (0, 0)))

    # Conv weight (H, E, 3) -> (3E, H): tap k occupies rows [k*E, (k+1)*E).
    w3 = jnp.transpose(weight, (2, 1, 0)).reshape(3 * E, H).astype(jnp.bfloat16)
    b2 = bias.reshape(1, H).astype(jnp.float32)

    # Boundary masks for the +/-1 shifts (same for every tile): 0 at the first / last position
    # of each L-segment, 1 elsewhere. Built host-side, stays resident in VMEM across the grid.
    pos = np.arange(tb * L) % L
    edge = jnp.asarray(
        np.stack([pos != 0, pos != (L - 1)], axis=1).astype(np.float32),
        dtype=jnp.bfloat16,
    )                                                          # (tb*L, 2)

    out = pl.pallas_call(
        char_encoder_kernel,
        out_shape=jax.ShapeDtypeStruct((Bp, H), jnp.float32),
        grid_spec=pltpu.PrefetchScalarGridSpec(
            num_scalar_prefetch=0,
            grid=(Bp // tb,),
            in_specs=[
                pl.BlockSpec((tb * L, E), lambda i: (i, 0)),   # x
                pl.BlockSpec((tb, L), lambda i: (i, 0)),       # mask (lane-dense block)
                pl.BlockSpec((tb * L, 2), lambda i: (0, 0)),   # edge masks, resident
                pl.BlockSpec((3 * E, H), lambda i: (0, 0)),    # packed weights, resident
                pl.BlockSpec((1, H), lambda i: (0, 0)),        # bias, resident
            ],
            out_specs=pl.BlockSpec((tb, H), lambda i: (i, 0)),
        ),
        compiler_params=pltpu.CompilerParams(
            dimension_semantics=("parallel",),                 # shards batch tiles across TCs
            vmem_limit_bytes=vmem_limit,
        ),
    )(x2, m2, edge, w3, b2)

    return out[:B]


def char_encoder_reference(x, mask, weight, bias):
    """Plain-JAX f32 reference replicating the PyTorch forward exactly."""
    B, L, E = x.shape
    xp = jnp.pad(x, ((0, 0), (1, 1), (0, 0)))                  # pad seq dim by 1 on each side
    conv = (
        jnp.einsum("ble,he->blh", xp[:, 0:L, :], weight[:, :, 0])
        + jnp.einsum("ble,he->blh", xp[:, 1:L + 1, :], weight[:, :, 1])
        + jnp.einsum("ble,he->blh", xp[:, 2:L + 2, :], weight[:, :, 2])
        + bias[None, None, :]
    )
    h = jnp.maximum(conv, 0.0)
    masked = h - ((1.0 - mask) * 1e10)[:, :, None]
    return jnp.max(masked, axis=1)


if __name__ == "__main__":
    B, L, E, H = 2, 8, 16, 32   # batch, char-seq-len, char_emb_dim, char_hidden_dim

    key = jax.random.PRNGKey(0)
    kx, km, kw, kb = jax.random.split(key, 4)

    x = jax.random.normal(kx, (B, L, E), dtype=jnp.float32)

    # mask: 1 = valid, 0 = padded; keep first positions valid
    mask = (jax.random.uniform(km, (B, L)) > 0.3).astype(jnp.float32)
    mask = mask.at[:, 0].set(1.0)

    # Conv1d weight (H, E, 3) with xavier_uniform_, bias with uniform_(0, 1)
    fan_in, fan_out = E * 3, H * 3
    bound = math.sqrt(6.0 / (fan_in + fan_out))
    weight = jax.random.uniform(kw, (H, E, 3), minval=-bound, maxval=bound, dtype=jnp.float32)
    bias = jax.random.uniform(kb, (H,), minval=0.0, maxval=1.0, dtype=jnp.float32)

    out = char_encoder_forward(x, mask, weight, bias)
    out = jax.block_until_ready(out)

    ref = char_encoder_reference(x, mask, weight, bias)
    assert out.shape == (B, H)
    # bf16 inputs/weights (f32 accumulation) => slightly looser tolerance than pure-f32.
    assert jnp.allclose(out, ref, atol=5e-2, rtol=5e-2), "mismatch vs reference"

    print("KERNEL_OK")
</pallas_src>

<mosaic_0001>
module attributes {stable_mosaic.version = 11 : i64} {
  func.func @char_encoder_kernel(%arg0: i32, %arg1: memref<16x16xbf16, #tpu.memory_space<vmem>>, %arg2: memref<2x8xf32, #tpu.memory_space<vmem>>, %arg3: memref<16x2xbf16, #tpu.memory_space<vmem>>, %arg4: memref<48x32xbf16, #tpu.memory_space<vmem>>, %arg5: memref<1x32xf32, #tpu.memory_space<vmem>>, %arg6: memref<2x32xf32, #tpu.memory_space<vmem>>) attributes {dimension_semantics = [#tpu.dimension_semantics<parallel>], iteration_bounds = array<i64: 1>, scalar_prefetch = 0 : i64, scratch_operands = 0 : i64, tpu.core_type = #tpu.core_type<tc>, window_params = [{transform_indices = @transform_0, window_bounds = array<i64: 16, 16>}, {transform_indices = @transform_1, window_bounds = array<i64: 2, 8>}, {pipeline_mode = #tpu.pipeline_mode<synchronous>, transform_indices = @transform_2, window_bounds = array<i64: 16, 2>}, {pipeline_mode = #tpu.pipeline_mode<synchronous>, transform_indices = @transform_3, window_bounds = array<i64: 48, 32>}, {pipeline_mode = #tpu.pipeline_mode<synchronous>, transform_indices = @transform_4, window_bounds = array<i64: 1, 32>}, {transform_indices = @transform_5, window_bounds = array<i64: 2, 32>}]} {
    %c0 = arith.constant 0 : index
    %c0_0 = arith.constant 0 : index
    %0 = vector.load %arg1[%c0, %c0_0] : memref<16x16xbf16, #tpu.memory_space<vmem>>, vector<16x16xbf16>
    %c0_1 = arith.constant 0 : index
    %c0_2 = arith.constant 0 : index
    %1 = vector.load %arg3[%c0_1, %c0_2] : memref<16x2xbf16, #tpu.memory_space<vmem>>, vector<16x2xbf16>
    %cst = arith.constant 0.000000e+00 : bf16
    %2 = vector.broadcast %cst : bf16 to vector<1x16xbf16>
    %3 = vector.extract_strided_slice %0 {offsets = [0, 0], sizes = [15, 16], strides = [1, 1]} : vector<16x16xbf16> to vector<15x16xbf16>
    %4 = tpu.concatenate %2, %3 in 0 : vector<1x16xbf16>, vector<15x16xbf16> -> vector<16x16xbf16>
    %5 = vector.extract_strided_slice %1 {offsets = [0, 0], sizes = [16, 1], strides = [1, 1]} : vector<16x2xbf16> to vector<16x1xbf16>
    %6 = vector.broadcast %5 : vector<16x1xbf16> to vector<16x16xbf16>
    %7 = arith.mulf %4, %6 : vector<16x16xbf16>
    %8 = vector.extract_strided_slice %0 {offsets = [1, 0], sizes = [15, 16], strides = [1, 1]} : vector<16x16xbf16> to vector<15x16xbf16>
    %9 = tpu.concatenate %8, %2 in 0 : vector<15x16xbf16>, vector<1x16xbf16> -> vector<16x16xbf16>
    %10 = vector.extract_strided_slice %1 {offsets = [0, 1], sizes = [16, 1], strides = [1, 1]} : vector<16x2xbf16> to vector<16x1xbf16>
    %11 = vector.broadcast %10 : vector<16x1xbf16> to vector<16x16xbf16>
    %12 = arith.mulf %9, %11 : vector<16x16xbf16>
    %13 = tpu.concatenate %7, %0, %12 in 1 : vector<16x16xbf16>, vector<16x16xbf16>, vector<16x16xbf16> -> vector<16x48xbf16>
    %c0_3 = arith.constant 0 : index
    %c0_4 = arith.constant 0 : index
    %14 = vector.load %arg4[%c0_3, %c0_4] : memref<48x32xbf16, #tpu.memory_space<vmem>>, vector<48x32xbf16>
    %cst_5 = arith.constant dense<0.000000e+00> : vector<16x32xf32>
    %15 = tpu.matmul %13, %14, %cst_5 {dimension_numbers = #tpu.dot_dimension_numbers<[1], [0], [0], [1], [0, 0, 1, 1], [], []>} : vector<16x48xbf16>, vector<48x32xbf16>, vector<16x32xf32> -> vector<16x32xf32>
    %c0_6 = arith.constant 0 : index
    %c0_7 = arith.constant 0 : index
    %16 = vector.load %arg5[%c0_6, %c0_7] : memref<1x32xf32, #tpu.memory_space<vmem>>, vector<1x32xf32>
    %17 = vector.broadcast %16 : vector<1x32xf32> to vector<16x32xf32>
    %18 = arith.addf %15, %17 : vector<16x32xf32>
    %cst_8 = arith.constant 0.000000e+00 : f32
    %19 = vector.broadcast %cst_8 : f32 to vector<16x32xf32>
    %20 = arith.maximumf %18, %19 : vector<16x32xf32>
    %21 = vector.shape_cast %20 : vector<16x32xf32> to vector<2x8x32xf32>
    %c0_9 = arith.constant 0 : index
    %c0_10 = arith.constant 0 : index
    %22 = vector.load %arg2[%c0_9, %c0_10] : memref<2x8xf32, #tpu.memory_space<vmem>>, vector<2x8xf32>
    %cst_11 = arith.constant 1.000000e+00 : f32
    %23 = vector.broadcast %cst_11 : f32 to vector<2x8xf32>
    %24 = arith.subf %23, %22 : vector<2x8xf32>
    %cst_12 = arith.constant 1.000000e+10 : f32
    %25 = vector.broadcast %cst_12 : f32 to vector<2x8xf32>
    %26 = arith.mulf %24, %25 : vector<2x8xf32>
    %27 = vector.shape_cast %26 : vector<2x8xf32> to vector<2x8x1xf32>
    %28 = vector.broadcast %27 : vector<2x8x1xf32> to vector<2x8x32xf32>
    %29 = arith.subf %21, %28 : vector<2x8x32xf32>
    %cst_13 = arith.constant dense<0xFF800000> : vector<2x32xf32>
    %30 = vector.multi_reduction <maximumf>, %29, %cst_13 [1] : vector<2x8x32xf32> to vector<2x32xf32>
    %c0_14 = arith.constant 0 : index
    %c0_15 = arith.constant 0 : index
    %31 = vector.load %arg6[%c0_14, %c0_15] : memref<2x32xf32, #tpu.memory_space<vmem>>, vector<2x32xf32>
    tpu.vector_store %arg6[%c0_14, %c0_15], %30 {strides = array<i32>} : memref<2x32xf32, #tpu.memory_space<vmem>>, vector<2x32xf32>,
    return
  }
  func.func @transform_0(%arg0: i32) -> (i32, i32) {
    %c0_i32 = arith.constant 0 : i32
    %c0_i32_0 = arith.constant 0 : i32
    return %arg0, %c0_i32 : i32, i32
  }
  func.func @transform_1(%arg0: i32) -> (i32, i32) {
    %c0_i32 = arith.constant 0 : i32
    %c0_i32_0 = arith.constant 0 : i32
    return %arg0, %c0_i32 : i32, i32
  }
  func.func @transform_2(%arg0: i32) -> (i32, i32) {
    %c0_i32 = arith.constant 0 : i32
    %c0_i32_0 = arith.constant 0 : i32
    %c0_i32_1 = arith.constant 0 : i32
    return %c0_i32, %c0_i32_0 : i32, i32
  }
  func.func @transform_3(%arg0: i32) -> (i32, i32) {
    %c0_i32 = arith.constant 0 : i32
    %c0_i32_0 = arith.constant 0 : i32
    %c0_i32_1 = arith.constant 0 : i32
    return %c0_i32, %c0_i32_0 : i32, i32
  }
  func.func @transform_4(%arg0: i32) -> (i32, i32) {
    %c0_i32 = arith.constant 0 : i32
    %c0_i32_0 = arith.constant 0 : i32
    %c0_i32_1 = arith.constant 0 : i32
    return %c0_i32, %c0_i32_0 : i32, i32
  }
  func.func @transform_5(%arg0: i32) -> (i32, i32) {
    %c0_i32 = arith.constant 0 : i32
    %c0_i32_0 = arith.constant 0 : i32
    return %arg0, %c0_i32 : i32, i32
  }
}

</mosaic_0001>

<llo_original>
// kernel: tpu_custom_call.1
$region0: #{tpu_custom_call.1}
  #allocation0 [shape = 'u32[]', space=smem, size = 0x4, offset = 0x4, fixed_abs, tag = 'smem constant byte address 0x4 - core index']
  #allocation1 [shape = 'u32[144,128]{1,0:T(1,128)}', space=vmem, size = 0x12000, scoped, tag = 'internal scratch']
  %s0 = inlined_call_operand.vmem [shape: bf16[16,16], index: 0, kind: input, shape index: {}]
  %s1 = inlined_call_operand.vmem [shape: f32[2,8], index: 1, kind: input, shape index: {}]
  %s2 = inlined_call_operand.vmem [shape: bf16[16,2], index: 2, kind: input, shape index: {}]
  %s3 = inlined_call_operand.vmem [shape: bf16[48,32], index: 3, kind: input, shape index: {}]
  %s4 = inlined_call_operand.vmem [shape: f32[1,32], index: 4, kind: input, shape index: {}]
  %s5 = inlined_call_operand.hbm [shape: f32[2,32], index: 5, kind: output, shape index: {}]
  %s6 = sld [smem:[#allocation0]]
  $region30: #{tpu_custom_call.1} parent=0
    _
  %s8 = ssub.s32 1, %s6
  %s9 = scalar_select 0, %s8, %s6
  $region1: #{tpu_custom_call.1} parent=0
    #allocation2 [shape = 'u8[1024]{0}', space=vmem, size = 0x400, scoped, tag = 'output window, operand 0, single buffered']
    #allocation3 [shape = 's32[1]{0}', space=sflag, size = 0x4, scoped, tag = 'scoped memory for tpu_custom_call.1']
    %10 = vsyncpa [#allocation3], 0
    // Predicated region
    $region2: #{tpu_custom_call.1} parent=1 // pred_check
      _
    $region3: #{tpu_custom_call.1} parent=1 // pred_check_branch
      %12 = sbr.rel (0) target = $region5
    $region4: #{tpu_custom_call.1} parent=1 // pred_region
      _
    $region5: #{tpu_custom_call.1} parent=1 // pred_fallthru
      _
    // Predicated region
    $region6: #{tpu_custom_call.1} parent=1 // pred_check
      _
    $region7: #{tpu_custom_call.1} parent=1 // pred_check_branch
      %14 = sbr.rel (0) target = $region9
    $region8: #{tpu_custom_call.1} parent=1 // pred_region
      _
    $region9: #{tpu_custom_call.1} parent=1 // pred_fallthru
      _
    // Predicated region
    $region10: #{tpu_custom_call.1} parent=1 // pred_check
      _
    $region11: #{tpu_custom_call.1} parent=1 // pred_check_branch
      %16 = sbr.rel (0) target = $region13
    $region12: #{tpu_custom_call.1} parent=1 // pred_region
      _
    $region13: #{tpu_custom_call.1} parent=1 // pred_fallthru
      _
    // Predicated region
    $region14: #{tpu_custom_call.1} parent=1 // pred_check
      _
    $region15: #{tpu_custom_call.1} parent=1 // pred_check_branch
      %18 = sbr.rel (0) target = $region17
    $region16: #{tpu_custom_call.1} parent=1 // pred_region
      _
    $region17: #{tpu_custom_call.1} parent=1 // pred_fallthru
      _
    // Predicated region
    $region18: #{tpu_custom_call.1} parent=1 // pred_check
      _
    $region19: #{tpu_custom_call.1} parent=1 // pred_check_branch
      %20 = sbr.rel (0) target = $region21
    $region20: #{tpu_custom_call.1} parent=1 // pred_region
      _
    $region21: #{tpu_custom_call.1} parent=1 // pred_fallthru
      _
    %v22 = vld [vmem:[%s0] sm:$0xf]
    %v23 = vld [vmem:[%s0 + $0x4] sm:$0xf]
    %v24 = vld [vmem:[%s2] sm:$0xf]
    %v25 = vld [vmem:[%s2 + $0x4] sm:$0xf]
    %v28 = vunpack.c.l.b16 %v22
    %v29 = vunpack.c.l.b16 %v23
    %v30 = vpack.c.b16 %v29, %v28
    %v32 = vshrl.u32 %v30, 16
    %v34 = vrot.slane %v32, 7
    %v35 = vshll.u32 %v30, 16
    %v37 = vor.u32 %v34, %v35
    %vm39 = vcmask 1040384
    %vm40 = vsmask.f32 256
    %vm41 = vmand %vm39, %vm40
    %v42 = vsel %vm41, 0, %v37
    %44 = vset.pattern.permute.xlu0 0
    %45 = vperm.xlu0 %44, %v24
    %v46 = vpop.permute.xlu0 %45
    %v49 = vunpack.c.l.s4 839922192
    %v50 = vunpack.c.0.s8 %v49
    %v51 = vlaneseq
    %v52 = vshrl.u32 %v51, 7
    %v53 = vsub.s32 %v50, %v52
    %v54 = vrot.slane %v46, %v53
    %56 = vset.pattern.permute.xlu0 0
    %57 = vperm.xlu0 %56, %v25
    %v58 = vpop.permute.xlu0 %57
    %v61 = vunpack.c.l.s4 839922192
    %v62 = vunpack.c.0.s8 %v61
    %v63 = vlaneseq
    %v64 = vshrl.u32 %v63, 7
    %v65 = vsub.s32 %v62, %v64
    %v66 = vrot.slane %v58, %v65
    %v69 = vunpack.c.l.b16 %v54
    %v70 = vunpack.c.l.b16 %v66
    %v71 = vpack.c.b16 %v70, %v69
    %v73 = vmul.bf16 %v42, %v71
    %v74 = vrot.slane %v35, 1
    %v75 = vor.u32 %v32, %v74
    %vm77 = vcmask 1047552
    %vm78 = vsmask.f32 7424
    %vm79 = vmand %vm77, %vm78
    %v80 = vsel %vm79, %v75, 0
    %81 = vset.pattern.permute.xlu0 1
    %82 = vperm.xlu0 %81, %v24
    %v83 = vpop.permute.xlu0 %82
    %v86 = vunpack.c.l.s4 839922192
    %v87 = vunpack.c.0.s8 %v86
    %v88 = vlaneseq
    %v89 = vshrl.u32 %v88, 7
    %v90 = vsub.s32 %v87, %v89
    %v91 = vrot.slane %v83, %v90
    %92 = vset.pattern.permute.xlu0 1
    %93 = vperm.xlu0 %92, %v25
    %v94 = vpop.permute.xlu0 %93
    %v97 = vunpack.c.l.s4 839922192
    %v98 = vunpack.c.0.s8 %v97
    %v99 = vlaneseq
    %v100 = vshrl.u32 %v99, 7
    %v101 = vsub.s32 %v98, %v100
    %v102 = vrot.slane %v94, %v101
    %v105 = vunpack.c.l.b16 %v91
    %v106 = vunpack.c.l.b16 %v102
    %v107 = vpack.c.b16 %v106, %v105
    %v109 = vmul.bf16 %v80, %v107
    %110 = vrot.lane.b32.xlu0 %v30, 16
    %v111 = vpop.permute.xlu0 %110
    %113 = vrot.lane.b32.xlu0 %v109, 32
    %v114 = vpop.permute.xlu0 %113
    %vm115 = vcmask 130048
    %v118 = vsel %vm115, %v73, %v111
    %vm119 = vcmask 261120
    %v121 = vsel %vm119, %v118, %v114
    %v122 = vld [vmem:[%s3] sm:$0xf]
    %v123 = vld [vmem:[%s3 + $0x4] sm:$0xf]
    %v124 = vld [vmem:[%s3 + $0x8] sm:$0xf]
    %v125 = vld [vmem:[%s3 + $0xc] sm:$0xf]
    %v126 = vld [vmem:[%s3 + $0x10] sm:$0xf]
    %v127 = vld [vmem:[%s3 + $0x14] sm:$0xf]
    %v128 = vld [vmem:[%s4] sm:$0x1]
    %v130 = vlaneseq
    %v131 = vshrl.u32 %v130, 7
    %v132 = vsub.s32 0, %v131
    %v133 = vrot.slane %v128, %v132
    %v141 = vunpack.c.l.b16 %v122
    %v142 = vunpack.c.l.b16 %v123
    %v143 = vunpack.c.l.b16 %v124
    %v144 = vunpack.c.l.b16 %v125
    %v145 = vunpack.c.l.b16 %v126
    %v146 = vunpack.c.l.b16 %v127
    %v147 = vpack.c.b16 %v142, %v141
    %v148 = vpack.c.b16 %v144, %v143
    %v149 = vpack.c.b16 %v146, %v145
    %vm153 = vcmask 392192
    %v154 = vsel %vm153, %v121, 0
    %156 = vmatprep.subr.bf16.mxu0 0
    %157 = vmatpush1.bf16.msra.mxu0 %v147
    %158 = vmatprep.subr.bf16.mxu0 0
    %159 = vmatpush1.bf16.msra.mxu0 %v148
    %160 = vmatprep.subr.bf16.mxu0 0
    %161 = vmatpush1.bf16.msra.mxu0 %v149
    %162 = vmatprep.subr.bf16.mxu0 0
    %163 = vmatpush1.bf16.msra.mxu0 0
    %164 = vmatprep.subr.bf16.mxu0 0
    %165 = vmatpush1.bf16.msra.mxu0 0
    %166 = vmatprep.subr.bf16.mxu0 0
    %167 = vmatpush1.bf16.msra.mxu0 0
    %168 = vmatprep.subr.bf16.mxu0 0
    %169 = vmatpush1.bf16.msra.mxu0 0
    %170 = vmatprep.subr.bf16.mxu0 0
    %171 = vmatpush1.bf16.msra.mxu0 0
    %172 = vmatprep.subr.bf16.mxu0 0
    %173 = vmatpush1.bf16.msra.mxu0 0
    %174 = vmatprep.subr.bf16.mxu0 0
    %175 = vmatpush1.bf16.msra.mxu0 0
    %176 = vmatprep.subr.bf16.mxu0 0
    %177 = vmatpush1.bf16.msra.mxu0 0
    %178 = vmatprep.subr.bf16.mxu0 0
    %179 = vmatpush1.bf16.msra.mxu0 0
    %180 = vmatprep.subr.bf16.mxu0 0
    %181 = vmatpush1.bf16.msra.mxu0 0
    %182 = vmatprep.subr.bf16.mxu0 0
    %183 = vmatpush1.bf16.msra.mxu0 0
    %184 = vmatprep.subr.bf16.mxu0 0
    %185 = vmatpush1.bf16.msra.mxu0 0
    %186 = vmatprep.subr.bf16.mxu0 0
    %187 = vmatpush1.bf16.msra.mxu0 0
    %188 = vmatprep.mubr.bf16.mxu0 0
    %189 = vmatmul.mubr.bf16.gmra.mrb[0].mxu0 %v154
    %v190 = vpop.f32.mrb[0].mxu0
    %v191 = vadd.f32 %v133, %v190
    %v192 = vpop.f32.mrb[0].mxu0
    %v193 = vpop.f32.mrb[0].mxu0
    %v194 = vadd.f32 %v133, %v193
    %v195 = vpop.f32.mrb[0].mxu0
    %196 = vdwg.mxu0
    %v197 = vmax.f32 %v191, 0.0
    %v198 = vmax.f32 %v194, 0.0
    %v199 = vld [vmem:[%s1] sm:$0x3]
    %v200 = vsub.f32 1.0, %v199
    %v201 = vmul.f32 %v200, 1e+10
    %v202 = vlaneseq
    %v203 = vshrl.u32 %v202, 7
    %v204 = vsub.s32 0, %v203
    %v205 = vrot.slane %v201, %v204
    %207 = vbcast.lane.b32.xlu0 %v205, 256
    %v208 = vpop.permute.xlu0 %207
    %v209 = vlaneseq
    %v210 = vshrl.u32 %v209, 7
    %v211 = vsub.s32 1, %v210
    %v212 = vrot.slane %v201, %v211
    %214 = vbcast.lane.b32.xlu0 %v212, 256
    %v215 = vpop.permute.xlu0 %214
    %v216 = vsub.f32 %v197, %v208
    %v217 = vsub.f32 %v198, %v215
    %v218 = vsel %vm119, %v216, -inf
    %v219 = vrot.slane %v218, 4
    %v220 = vmax.f32 %v218, %v219
    %v221 = vrot.slane %v220, 2
    %v222 = vmax.f32 %v220, %v221
    %v223 = vrot.slane %v222, 1
    %v224 = vmax.f32 %v222, %v223
    %v225 = vsel %vm119, %v217, -inf
    %v226 = vrot.slane %v225, 4
    %v227 = vmax.f32 %v225, %v226
    %v228 = vrot.slane %v227, 2
    %v229 = vmax.f32 %v227, %v228
    %v230 = vrot.slane %v229, 1
    %v231 = vmax.f32 %v229, %v230
    %vm234 = vcmask 1041409
    %v235 = vsel %vm234, %v231, %v224
    %vm237 = vcmask 254976
    %238 = vst.msk [vmem:[#allocation2] sm:$0x3] %vm237, %v235
    // Predicated region
    $region22: #{tpu_custom_call.1} parent=1 // pred_check
      _
    $region23: #{tpu_custom_call.1} parent=1 // pred_check_branch
      %240 = sbr.rel (0) target = $region25
    $region24: #{tpu_custom_call.1} parent=1 // pred_region
      %s242 = ssub.s32 32, 32
      %243 = vsyncadd [#allocation3], %s242
      %s245 = sshll.u32 [#allocation2], 4
      %s246 = int_to_ptr.vmem [resolvable:$true] %s245
      %248 = dma.vmem_to_hbm [thread:$0]  %s246, 32, %s5, [#allocation3]
    $region25: #{tpu_custom_call.1} parent=1 // pred_fallthru
      _
    // Predicated region
    $region26: #{tpu_custom_call.1} parent=1 // pred_check
      _
    $region27: #{tpu_custom_call.1} parent=1 // pred_check_branch
      %250 = sbr.rel (0) target = $region29
    $region28: #{tpu_custom_call.1} parent=1 // pred_region
      %251 = dma.done [#allocation3], 32
    $region29: #{tpu_custom_call.1} parent=1 // pred_fallthru
      _
    %252 = vsyncpa [#allocation3], 1

</llo_original>
